<compile_context>
chip_gen: v7x
topology: tpu7x:2x2x1
jax: 0.10.0
libtpu: 0.0.40
codegen_flags: <defaults>
</compile_context>

<pallas_src>
import functools

import numpy as np
import jax
import jax.numpy as jnp
from jax.experimental import pallas as pl
from jax.experimental.pallas import tpu as pltpu


TOGGLE_RATE = 0.1
# Raw 32-bit threshold: P(bits <= T) = (T+1)/2^32 ~= 0.1.
_THRESHOLD_U32 = np.uint32(int(TOGGLE_RATE * (1 << 32)))   # 429496729
_DEFAULT_BLOCK_ROWS = 4096   # (4096,128) u32 + f32, double-buffered = 8 MiB


def _threshold_kernel(bits_ref, out_ref):
    """bits_ref: (tb, 128) uint32; out_ref: (tb, 128) float32 in {0.0, 1.0}."""
    keep = bits_ref[...] <= _THRESHOLD_U32           # single VPU compare
    out_ref[...] = jnp.where(keep, 1.0, 0.0).astype(out_ref.dtype)  # one vselect


def _pick_block_rows(rows, block_rows):
    """Static (Python-int) tile selection: sublane-aligned, >=2 grid steps."""
    if rows <= 8:
        return rows                     # full-array block (always legal)
    half = ((pl.cdiv(rows, 2) + 7) // 8) * 8   # split across 2 TCs on v7x
    tb = min(block_rows, half)
    return max(8, (tb // 8) * 8)


@functools.partial(
    jax.jit,
    static_argnames=("instances", "action_width", "action_height", "block_rows"),
)
def _random_agent_forward_impl(seed, instances, action_width, action_height,
                               block_rows):
    total = instances * action_width * action_height
    rows = pl.cdiv(total, 128)                    # lane-dense slab
    tb = _pick_block_rows(rows, block_rows)
    grid = (pl.cdiv(rows, tb),)

    key = jax.random.PRNGKey(seed)                # seed is traced data
    bits = jax.random.bits(key, (rows, 128), dtype=jnp.uint32)

    flat = pl.pallas_call(
        _threshold_kernel,
        out_shape=jax.ShapeDtypeStruct((rows, 128), jnp.float32),
        grid=grid,
        in_specs=[pl.BlockSpec((tb, 128), lambda i: (i, 0))],
        out_specs=pl.BlockSpec((tb, 128), lambda i: (i, 0)),
        compiler_params=pltpu.CompilerParams(
            dimension_semantics=("parallel",)),
    )(bits)

    flat = flat.reshape(-1)[:total]               # drop lane padding (static)
    return flat.reshape(instances, 1, action_width, action_height)


def random_agent_forward(obs, *, action_width=64, action_height=64, seed=0,
                         block_rows=_DEFAULT_BLOCK_ROWS):
    """Pallas implementation of RandomAgent.forward.

    obs: any array whose leading dim is the number of instances (NCHW).
    Returns float32 (N, 1, action_width, action_height) with values in
    {0.0, 1.0}, each 1.0 with probability ~toggle_rate (0.1).
    """
    return _random_agent_forward_impl(
        jnp.uint32(seed), obs.shape[0], action_width, action_height, block_rows)


if __name__ == "__main__":
    key = jax.random.PRNGKey(0)
    # Small observation consistent with the module (NCHW); contents unused.
    obs = jax.random.uniform(key, (2, 1, 32, 32), dtype=jnp.float32)

    action = random_agent_forward(obs, action_width=64, action_height=64, seed=0)
    action = jax.block_until_ready(action)

    assert action.shape == (2, 1, 64, 64), action.shape
    assert action.dtype == jnp.float32
    # values must be exactly 0.0 or 1.0
    assert bool(jnp.all((action == 0.0) | (action == 1.0)))
    # fraction of ones should be roughly toggle_rate
    frac = float(jnp.mean(action))
    assert 0.0 < frac < 0.3, frac

    # Different seed: same cached compilation (seed is data, not a constant).
    action2 = jax.block_until_ready(random_agent_forward(obs, seed=1))
    assert action2.shape == (2, 1, 64, 64)
    assert bool(jnp.all((action2 == 0.0) | (action2 == 1.0)))

    print("KERNEL_OK")
</pallas_src>

<mosaic_0001>
module attributes {stable_mosaic.version = 11 : i64} {
  func.func @_threshold_kernel(%arg0: i32, %arg1: memref<32x128xi32, #tpu.memory_space<vmem>>, %arg2: memref<32x128xf32, #tpu.memory_space<vmem>>) attributes {dimension_semantics = [#tpu.dimension_semantics<parallel>], iteration_bounds = array<i64: 2>, scalar_prefetch = 0 : i64, scratch_operands = 0 : i64, tpu.core_type = #tpu.core_type<tc>, window_params = [{transform_indices = @transform_0, window_bounds = array<i64: 32, 128>}, {transform_indices = @transform_1, window_bounds = array<i64: 32, 128>}]} {
    %c0 = arith.constant 0 : index
    %c0_0 = arith.constant 0 : index
    %0 = vector.load %arg1[%c0, %c0_0] : memref<32x128xi32, #tpu.memory_space<vmem>>, vector<32x128xi32>
    %c429496729_i32 = arith.constant 429496729 : i32
    %1 = vector.broadcast %c429496729_i32 : i32 to vector<32x128xi32>
    %2 = arith.cmpi ule, %0, %1 : vector<32x128xi32>
    %cst = arith.constant 1.000000e+00 : f32
    %cst_1 = arith.constant 0.000000e+00 : f32
    %3 = vector.broadcast %cst : f32 to vector<32x128xf32>
    %4 = vector.broadcast %cst_1 : f32 to vector<32x128xf32>
    %5 = arith.select %2, %3, %4 : vector<32x128xi1>, vector<32x128xf32>
    %c0_2 = arith.constant 0 : index
    %c0_3 = arith.constant 0 : index
    %6 = vector.load %arg2[%c0_2, %c0_3] : memref<32x128xf32, #tpu.memory_space<vmem>>, vector<32x128xf32>
    tpu.vector_store %arg2[%c0_2, %c0_3], %5 {strides = array<i32>} : memref<32x128xf32, #tpu.memory_space<vmem>>, vector<32x128xf32>,
    return
  }
  func.func @transform_0(%arg0: i32) -> (i32, i32) {
    %c0_i32 = arith.constant 0 : i32
    %c0_i32_0 = arith.constant 0 : i32
    return %arg0, %c0_i32 : i32, i32
  }
  func.func @transform_1(%arg0: i32) -> (i32, i32) {
    %c0_i32 = arith.constant 0 : i32
    %c0_i32_0 = arith.constant 0 : i32
    return %arg0, %c0_i32 : i32, i32
  }
}

</mosaic_0001>

<llo_original>
// kernel: _random_agent_forward_impl.1
$region0: #{_random_agent_forward_impl.1}
  #allocation0 [shape = 'u32[]', space=smem, size = 0x4, offset = 0x4, fixed_abs, tag = 'smem constant byte address 0x4 - core index']
  #allocation1 [shape = 'u32[144,128]{1,0:T(1,128)}', space=vmem, size = 0x12000, scoped, tag = 'internal scratch']
  %s0 = inlined_call_operand.vmem [shape: u32[64,128], index: 0, kind: input, shape index: {}]
  %s1 = inlined_call_operand.vmem [shape: f32[64,128], index: 1, kind: output, shape index: {}]
  %s2 = sld [smem:[#allocation0]]
  $region37: #{_random_agent_forward_impl.1} parent=0
    _
  %s4 = ssub.s32 1, %s2
  %s5 = scalar_select 0, %s4, %s2
  loop: start=0, step=1, limit=4
  $region2: #{_random_agent_forward_impl.1} parent=0 // loop_pre_header
    _
  $region3: #{_random_agent_forward_impl.1} parent=0 // loop_header
    %s7 = sphi 0, %s11
    %p8 = scmp.ge.s32.totalorder %s7, 4
    %s17 = sphi 0, %s19
    %s20 = sphi 0, %s17
    %s21 = sphi 0, %s20
    %s37 = sphi 0, %s21
    %s43 = sphi 0, %s45
    %s46 = sphi 0, %s43
    %s47 = sphi 0, %s46
    %s63 = sphi 0, %s47
  $region4: #{_random_agent_forward_impl.1} parent=0 // loop_header_branch
    %10 = sbr.rel (%p8) target = $region8
  $region5: #{_random_agent_forward_impl.1} parent=0 // loop_body
    %s12 = ssub.s32 %s7, 1
    %s13 = ssub.s32 %s7, 2
    %s14 = sadd.s32 %s7, 1
    %s15 = ssub.s32 %s7, %s14
    %p16 = scmp.eq.s32.totalorder %s15, 0
    %s18 = sadd.s32 %s17, 1
    %s19 = scalar_select %p16, %s17, %s18
    %p22 = pneg %p16
    %p23 = scmp.eq.s32.totalorder %s7, 1
    %p24 = por %p22, %p23
    %p25 = scmp.ne.s32.totalorder %s17, %s20
    %p26 = scmp.eq.s32.totalorder %s7, 0
    %p27 = por %p25, %p26
    %p28 = scmp.ne.s32.totalorder %s17, %s20
    %p29 = scmp.eq.s32.totalorder %s12, 1
    %p30 = por %p28, %p29
    %p31 = scmp.ne.s32.totalorder %s20, %s21
    %p32 = scmp.eq.s32.totalorder %s12, 0
    %p33 = por %p31, %p32
    %p34 = scmp.ne.s32.totalorder %s20, %s21
    %p35 = scmp.eq.s32.totalorder %s13, 1
    %p36 = por %p34, %p35
    %p38 = scmp.ne.s32.totalorder %s21, %s37
    %p39 = scmp.eq.s32.totalorder %s13, 0
    %p40 = por %p38, %p39
    %s41 = ssub.s32 %s7, %s14
    %p42 = scmp.eq.s32.totalorder %s41, 0
    %s44 = sadd.s32 %s43, 1
    %s45 = scalar_select %p42, %s43, %s44
    %p48 = pneg %p42
    %p49 = scmp.eq.s32.totalorder %s7, 1
    %p50 = por %p48, %p49
    %p51 = scmp.ne.s32.totalorder %s43, %s46
    %p52 = scmp.eq.s32.totalorder %s7, 0
    %p53 = por %p51, %p52
    %p54 = scmp.ne.s32.totalorder %s43, %s46
    %p55 = scmp.eq.s32.totalorder %s12, 1
    %p56 = por %p54, %p55
    %p57 = scmp.ne.s32.totalorder %s46, %s47
    %p58 = scmp.eq.s32.totalorder %s12, 0
    %p59 = por %p57, %p58
    %p60 = scmp.ne.s32.totalorder %s46, %s47
    %p61 = scmp.eq.s32.totalorder %s13, 1
    %p62 = por %p60, %p61
    %p64 = scmp.ne.s32.totalorder %s47, %s63
    %p65 = scmp.eq.s32.totalorder %s13, 0
    %p66 = por %p64, %p65
    %p67 = scmp.le.s32.totalorder 1, %s7
    %p68 = scmp.lt.s32.totalorder %s7, 3
    %p69 = pnand %p67, %p68
    %p70 = pneg %p69
    // Predicated region
    $region9: #{_random_agent_forward_impl.1} parent=5 // pred_check
      _
    $region10: #{_random_agent_forward_impl.1} parent=5 // pred_check_branch
      %72 = sbr.rel (%p69) target = $region12
    $region11: #{_random_agent_forward_impl.1} parent=5 // pred_region
      %s73 = ssub.s32 %s7, 1
    $region12: #{_random_agent_forward_impl.1} parent=5 // pred_fallthru
      _
    %p74 = scmp.lt.s32.totalorder %s7, 2
    // Predicated region
    $region13: #{_random_agent_forward_impl.1} parent=5 // pred_check
      %p75 = pneg %p74
    $region14: #{_random_agent_forward_impl.1} parent=5 // pred_check_branch
      %77 = sbr.rel (%p75) target = $region16
    $region15: #{_random_agent_forward_impl.1} parent=5 // pred_region
      // Predicated region
      $region17: #{_random_agent_forward_impl.1} parent=15 // pred_check
        %p78 = pneg %p27
      $region18: #{_random_agent_forward_impl.1} parent=15 // pred_check_branch
        %80 = sbr.rel (%p78) target = $region20
      $region19: #{_random_agent_forward_impl.1} parent=15 // pred_region
        %s81 = smul.u32 4, %s7
        %p82 = scmp.lt.s32.totalorder %s81, 7
        %s83 = scalar_select %p82, %s81, 7
        %s84 = smul.addr %s83, 8
        %s85 = scalar_lea.vmem %s0, %s84
        %s86 = smul.u32 4, %s7
      $region20: #{_random_agent_forward_impl.1} parent=15 // pred_fallthru
        _
    $region16: #{_random_agent_forward_impl.1} parent=5 // pred_fallthru
      _
    %p87 = scmp.le.s32.totalorder 1, %s7
    %p88 = scmp.lt.s32.totalorder %s7, 3
    %p89 = pnand %p87, %p88
    %p90 = pneg %p89
    // Predicated region
    $region21: #{_random_agent_forward_impl.1} parent=5 // pred_check
      _
    $region22: #{_random_agent_forward_impl.1} parent=5 // pred_check_branch
      %92 = sbr.rel (%p89) target = $region24
    $region23: #{_random_agent_forward_impl.1} parent=5 // pred_region
      %s93 = ssub.s32 %s7, 1
      %s94 = smul.u32 4, %s12
      %p95 = scmp.lt.s32.totalorder %s94, 7
      %s96 = scalar_select %p95, %s94, 7
      %s97 = smul.addr %s96, 8
      %s98 = scalar_lea.vmem %s0, %s97
      %p99 = pneg %p33
      %p100 = pneg %p30
      %p101 = pneg %p59
      %p102 = pneg %p56
      %s103 = smul.u32 4, %s12
      %p104 = scmp.lt.s32.totalorder %s103, 7
      %s105 = scalar_select %p104, %s103, 7
      %s106 = smul.addr %s105, 8
      %s107 = scalar_lea.vmem %s1, %s106
      %s108 = smul.u32 4, %s12
      %p109 = scmp.lt.s32.totalorder %s108, 7
      %s110 = scalar_select %p109, %s108, 7
      %s111 = smul.addr %s110, 8
      %s112 = scalar_lea.vmem %s0, %s111
      %s113 = smul.u32 4, %s12
      %s114 = smul.u32 4, %s12
      %p115 = scmp.lt.s32.totalorder %s114, 7
      %s116 = scalar_select %p115, %s114, 7
      %s117 = smul.addr %s116, 8
      %s118 = scalar_lea.vmem %s1, %s117
      %s119 = smul.u32 4, %s12
      %v120 = vld [vmem:[%s112] sm:$0xff]
      %v121 = vld [vmem:[%s112 + $0x8] sm:$0xff]
      %v122 = vld [vmem:[%s112 + $0x10] sm:$0xff]
      %v123 = vld [vmem:[%s112 + $0x18] sm:$0xff]
      %vm124 = vcmp.le.u32.totalorder %v120, 429496729
      %vm125 = vcmp.le.u32.totalorder %v121, 429496729
      %vm126 = vcmp.le.u32.totalorder %v122, 429496729
      %vm127 = vcmp.le.u32.totalorder %v123, 429496729
      %v128 = vsel %vm124, 1.0, 0.0
      %v129 = vsel %vm125, 1.0, 0.0
      %v130 = vsel %vm126, 1.0, 0.0
      %v131 = vsel %vm127, 1.0, 0.0
      %132 = vst [vmem:[%s118] sm:$0xff] %v128
      %133 = vst [vmem:[%s118 + $0x8] sm:$0xff] %v129
      %134 = vst [vmem:[%s118 + $0x10] sm:$0xff] %v130
      %135 = vst [vmem:[%s118 + $0x18] sm:$0xff] %v131
      %s136 = smul.u32 4, %s12
      %p137 = scmp.lt.s32.totalorder %s136, 7
      %s138 = scalar_select %p137, %s136, 7
      %s139 = smul.addr %s138, 8
      %s140 = scalar_lea.vmem %s1, %s139
      // Predicated region
      $region25: #{_random_agent_forward_impl.1} parent=23 // pred_check
        %p141 = pneg %p56
      $region26: #{_random_agent_forward_impl.1} parent=23 // pred_check_branch
        %143 = sbr.rel (%p141) target = $region28
      $region27: #{_random_agent_forward_impl.1} parent=23 // pred_region
        %s144 = smul.u32 4, %s12
      $region28: #{_random_agent_forward_impl.1} parent=23 // pred_fallthru
        _
    $region24: #{_random_agent_forward_impl.1} parent=5 // pred_fallthru
      _
    %p145 = scmp.le.s32.totalorder 2, %s7
    // Predicated region
    $region29: #{_random_agent_forward_impl.1} parent=5 // pred_check
      %p146 = pneg %p145
    $region30: #{_random_agent_forward_impl.1} parent=5 // pred_check_branch
      %148 = sbr.rel (%p146) target = $region32
    $region31: #{_random_agent_forward_impl.1} parent=5 // pred_region
      %s149 = ssub.s32 %s7, 2
      // Predicated region
      $region33: #{_random_agent_forward_impl.1} parent=31 // pred_check
        %p150 = pneg %p62
      $region34: #{_random_agent_forward_impl.1} parent=31 // pred_check_branch
        %152 = sbr.rel (%p150) target = $region36
      $region35: #{_random_agent_forward_impl.1} parent=31 // pred_region
        %s153 = smul.u32 4, %s13
        %p154 = scmp.lt.s32.totalorder %s153, 7
        %s155 = scalar_select %p154, %s153, 7
        %s156 = smul.addr %s155, 8
        %s157 = scalar_lea.vmem %s1, %s156
      $region36: #{_random_agent_forward_impl.1} parent=31 // pred_fallthru
        _
    $region32: #{_random_agent_forward_impl.1} parent=5 // pred_fallthru
      _
  $region6: #{_random_agent_forward_impl.1} parent=0 // loop_footer
    %s11 = sadd.s32 1, %s7
  $region7: #{_random_agent_forward_impl.1} parent=0 // loop_footer_branch
    %6 = sbr.rel target = $region3
  $region8: #{_random_agent_forward_impl.1} parent=0 // loop_exit
    _

</llo_original>
